<compile_context>
chip_gen: v7x
topology: tpu7x:2x2x1
jax: 0.10.0
libtpu: 0.0.40
codegen_flags: <defaults>
</compile_context>

<pallas_src>
import jax
import jax.numpy as jnp
from jax.experimental import pallas as pl
from jax.experimental.pallas import tpu as pltpu


def _gcn_kernel_bias(x_ref, adj_ref, w_ref, b_ref, out_ref):
    """One grid step = one batch element, full node set resident in VMEM."""
    # (n_n, F_in) @ (F_in, F_out) + (F_out,)  -> lane-dense (n_n, F_out)
    xw = jnp.dot(x_ref[0], w_ref[...], preferred_element_type=jnp.float32) + b_ref[0]
    # (n_n, n_n) @ (n_n, F_out) -> (n_n, F_out), contiguous lane-dense store
    out_ref[0] = jnp.dot(adj_ref[0], xw,
                         preferred_element_type=jnp.float32).astype(out_ref.dtype)


def _gcn_kernel_nobias(x_ref, adj_ref, w_ref, out_ref):
    xw = jnp.dot(x_ref[0], w_ref[...], preferred_element_type=jnp.float32)
    out_ref[0] = jnp.dot(adj_ref[0], xw,
                         preferred_element_type=jnp.float32).astype(out_ref.dtype)


def graph_convolution(x, adj, weight, bias=None):
    """
    x      : (bs, n_n, F_in)  float32
    adj    : (bs, n_n, n_n)   float32
    weight : (F_out, F_in)    float32   (torch nn.Linear layout)
    bias   : (F_out,) float32 or None
    returns (out (bs, n_n, F_out), adj[:, None, :, :])
    """
    bs, n_n, f_in = x.shape
    f_out = weight.shape[0]

    # Pre-transpose the weight on the host so the kernel computes x @ W_t directly
    # (lane-dense output, no in-kernel transpose / relayout).
    w_t = jnp.asarray(weight, jnp.float32).T  # (F_in, F_out)

    per_batch = lambda b: (b, 0, 0)
    shared2d = lambda b: (0, 0)

    in_specs = [
        pl.BlockSpec((1, n_n, f_in), per_batch),   # x
        pl.BlockSpec((1, n_n, n_n), per_batch),    # adj
        pl.BlockSpec((f_in, f_out), shared2d),     # W^T (resident across grid)
    ]
    args = [x, adj, w_t]

    if bias is not None:
        in_specs.append(pl.BlockSpec((1, f_out), shared2d))
        args.append(jnp.asarray(bias, jnp.float32).reshape(1, f_out))
        kernel = _gcn_kernel_bias
    else:
        kernel = _gcn_kernel_nobias

    # Size the scoped-VMEM budget from the real working set (double-buffered per-batch
    # blocks + resident weights) with headroom; cap at 64 MiB (v7x per-TC VMEM).
    block_bytes = 4 * (n_n * f_in + n_n * n_n + n_n * f_out)
    weight_bytes = 4 * (f_in * f_out + f_out)
    vmem_limit = int(min(max(2 * block_bytes + weight_bytes + (4 << 20), 16 << 20),
                         64 << 20))

    out = pl.pallas_call(
        kernel,
        out_shape=jax.ShapeDtypeStruct((bs, n_n, f_out), x.dtype),
        grid_spec=pltpu.PrefetchScalarGridSpec(
            num_scalar_prefetch=0,
            grid=(bs,),
            in_specs=in_specs,
            out_specs=pl.BlockSpec((1, n_n, f_out), per_batch),
        ),
        compiler_params=pltpu.CompilerParams(
            dimension_semantics=("parallel",),
            vmem_limit_bytes=vmem_limit,
        ),
    )(*args)

    # torch: adj.unsqueeze(1) — pure metadata reshape, no kernel / data movement needed.
    adj_out = adj[:, None, :, :]
    return out, adj_out


# TODO(synk): for very large graphs (n_n >~ 2048) add a row-tiled grid axis over the
# output nodes (adj rows) and cast MXU operands to bf16 with f32 accumulation; not needed
# at these shapes.


if __name__ == "__main__":
    key = jax.random.PRNGKey(0)
    k_w, k_b, k_x, k_adj = jax.random.split(key, 4)

    bs, n_nodes = 2, 16
    in_features, out_features = 8, 32

    # nn.Linear-style parameters: weight (F_out, F_in), bias (F_out,)
    bound = 1.0 / (in_features ** 0.5)
    weight = jax.random.uniform(k_w, (out_features, in_features), jnp.float32,
                                -bound, bound)
    bias = jax.random.uniform(k_b, (out_features,), jnp.float32, -bound, bound)

    x = jax.random.normal(k_x, (bs, n_nodes, in_features), jnp.float32)
    adj = (jax.random.uniform(k_adj, (bs, n_nodes, n_nodes)) > 0.4).astype(jnp.float32)
    adj = jnp.maximum(adj, jnp.eye(n_nodes, dtype=jnp.float32)[None])  # self loops

    out, adj_out = graph_convolution(x, adj, weight, bias)
    jax.block_until_ready((out, adj_out))

    # Pure-JAX reference mirroring the torch forward: adj @ (x @ W^T + b)
    ref = jnp.matmul(adj, x @ weight.T + bias)
    assert out.shape == (bs, n_nodes, out_features)
    assert adj_out.shape == (bs, 1, n_nodes, n_nodes)
    assert jnp.allclose(out, ref, atol=1e-5, rtol=1e-5)
    assert jnp.array_equal(adj_out, adj[:, None, :, :])

    # also exercise the bias=False variant (separate traced kernel, no zeros DMA)
    out_nb, _ = graph_convolution(x, adj, weight, bias=None)
    jax.block_until_ready(out_nb)
    assert jnp.allclose(out_nb, jnp.matmul(adj, x @ weight.T), atol=1e-5, rtol=1e-5)

    print("KERNEL_OK")
</pallas_src>

<mosaic_0001>
module attributes {stable_mosaic.version = 11 : i64} {
  func.func @_gcn_kernel_bias(%arg0: i32, %arg1: memref<1x16x8xf32, #tpu.memory_space<vmem>>, %arg2: memref<1x16x16xf32, #tpu.memory_space<vmem>>, %arg3: memref<8x32xf32, #tpu.memory_space<vmem>>, %arg4: memref<1x32xf32, #tpu.memory_space<vmem>>, %arg5: memref<1x16x32xf32, #tpu.memory_space<vmem>>) attributes {dimension_semantics = [#tpu.dimension_semantics<parallel>], iteration_bounds = array<i64: 2>, scalar_prefetch = 0 : i64, scratch_operands = 0 : i64, tpu.core_type = #tpu.core_type<tc>, window_params = [{transform_indices = @transform_0, window_bounds = array<i64: 1, 16, 8>}, {transform_indices = @transform_1, window_bounds = array<i64: 1, 16, 16>}, {pipeline_mode = #tpu.pipeline_mode<synchronous>, transform_indices = @transform_2, window_bounds = array<i64: 8, 32>}, {pipeline_mode = #tpu.pipeline_mode<synchronous>, transform_indices = @transform_3, window_bounds = array<i64: 1, 32>}, {transform_indices = @transform_4, window_bounds = array<i64: 1, 16, 32>}]} {
    %c0 = arith.constant 0 : index
    %c0_0 = arith.constant 0 : index
    %c0_1 = arith.constant 0 : index
    %0 = vector.load %arg1[%c0, %c0_0, %c0_1] : memref<1x16x8xf32, #tpu.memory_space<vmem>>, vector<1x16x8xf32>
    %1 = vector.shape_cast %0 : vector<1x16x8xf32> to vector<16x8xf32>
    %c0_2 = arith.constant 0 : index
    %c0_3 = arith.constant 0 : index
    %2 = vector.load %arg3[%c0_2, %c0_3] : memref<8x32xf32, #tpu.memory_space<vmem>>, vector<8x32xf32>
    %cst = arith.constant dense<0.000000e+00> : vector<16x32xf32>
    %3 = tpu.matmul %1, %2, %cst {dimension_numbers = #tpu.dot_dimension_numbers<[1], [0], [0], [1], [0, 0, 1, 1], [], []>} : vector<16x8xf32>, vector<8x32xf32>, vector<16x32xf32> -> vector<16x32xf32>
    %c0_4 = arith.constant 0 : index
    %c0_5 = arith.constant 0 : index
    %4 = vector.load %arg4[%c0_4, %c0_5] : memref<1x32xf32, #tpu.memory_space<vmem>>, vector<1x32xf32>
    %5 = vector.shape_cast %4 : vector<1x32xf32> to vector<32xf32>
    %6 = vector.shape_cast %5 : vector<32xf32> to vector<1x32xf32>
    %7 = vector.broadcast %6 : vector<1x32xf32> to vector<16x32xf32>
    %8 = arith.addf %3, %7 : vector<16x32xf32>
    %c0_6 = arith.constant 0 : index
    %c0_7 = arith.constant 0 : index
    %c0_8 = arith.constant 0 : index
    %9 = vector.load %arg2[%c0_6, %c0_7, %c0_8] : memref<1x16x16xf32, #tpu.memory_space<vmem>>, vector<1x16x16xf32>
    %10 = vector.shape_cast %9 : vector<1x16x16xf32> to vector<16x16xf32>
    %cst_9 = arith.constant dense<0.000000e+00> : vector<16x32xf32>
    %11 = tpu.matmul %10, %8, %cst_9 {dimension_numbers = #tpu.dot_dimension_numbers<[1], [0], [0], [1], [0, 0, 1, 1], [], []>} : vector<16x16xf32>, vector<16x32xf32>, vector<16x32xf32> -> vector<16x32xf32>
    %c0_10 = arith.constant 0 : index
    %c0_11 = arith.constant 0 : index
    %c0_12 = arith.constant 0 : index
    %12 = vector.load %arg5[%c0_10, %c0_11, %c0_12] : memref<1x16x32xf32, #tpu.memory_space<vmem>>, vector<1x16x32xf32>
    %13 = vector.shape_cast %12 : vector<1x16x32xf32> to vector<16x32xf32>
    %14 = vector.shape_cast %11 : vector<16x32xf32> to vector<1x16x32xf32>
    tpu.vector_store %arg5[%c0_10, %c0_11, %c0_12], %14 {strides = array<i32>} : memref<1x16x32xf32, #tpu.memory_space<vmem>>, vector<1x16x32xf32>,
    return
  }
  func.func @transform_0(%arg0: i32) -> (i32, i32, i32) {
    %c0_i32 = arith.constant 0 : i32
    %c0_i32_0 = arith.constant 0 : i32
    %c0_i32_1 = arith.constant 0 : i32
    return %arg0, %c0_i32, %c0_i32_0 : i32, i32, i32
  }
  func.func @transform_1(%arg0: i32) -> (i32, i32, i32) {
    %c0_i32 = arith.constant 0 : i32
    %c0_i32_0 = arith.constant 0 : i32
    %c0_i32_1 = arith.constant 0 : i32
    return %arg0, %c0_i32, %c0_i32_0 : i32, i32, i32
  }
  func.func @transform_2(%arg0: i32) -> (i32, i32) {
    %c0_i32 = arith.constant 0 : i32
    %c0_i32_0 = arith.constant 0 : i32
    %c0_i32_1 = arith.constant 0 : i32
    return %c0_i32, %c0_i32_0 : i32, i32
  }
  func.func @transform_3(%arg0: i32) -> (i32, i32) {
    %c0_i32 = arith.constant 0 : i32
    %c0_i32_0 = arith.constant 0 : i32
    %c0_i32_1 = arith.constant 0 : i32
    return %c0_i32, %c0_i32_0 : i32, i32
  }
  func.func @transform_4(%arg0: i32) -> (i32, i32, i32) {
    %c0_i32 = arith.constant 0 : i32
    %c0_i32_0 = arith.constant 0 : i32
    %c0_i32_1 = arith.constant 0 : i32
    return %arg0, %c0_i32, %c0_i32_0 : i32, i32, i32
  }
}

</mosaic_0001>

<llo_original>
// kernel: tpu_custom_call.1
$region0: #{tpu_custom_call.1}
  #allocation0 [shape = 'u32[]', space=smem, size = 0x4, offset = 0x4, fixed_abs, tag = 'smem constant byte address 0x4 - core index']
  #allocation1 [shape = 'u32[144,128]{1,0:T(1,128)}', space=vmem, size = 0x12000, scoped, tag = 'internal scratch']
  %s0 = inlined_call_operand.vmem [shape: f32[2,16,8], index: 0, kind: input, shape index: {}]
  %s1 = inlined_call_operand.vmem [shape: f32[2,16,16], index: 1, kind: input, shape index: {}]
  %s2 = inlined_call_operand.vmem [shape: f32[8,32], index: 2, kind: input, shape index: {}]
  %s3 = inlined_call_operand.vmem [shape: f32[1,32], index: 3, kind: input, shape index: {}]
  %s4 = inlined_call_operand.hbm [shape: f32[2,16,32], index: 4, kind: output, shape index: {}]
  %s5 = sld [smem:[#allocation0]]
  $region49: #{tpu_custom_call.1} parent=0
    _
  %s7 = ssub.s32 1, %s5
  %s8 = scalar_select 0, %s7, %s5
  $region1: #{tpu_custom_call.1} parent=0
    #allocation2 [shape = 'u8[16384]{0}', space=vmem, size = 0x4000, scoped, tag = 'output window, operand 0']
    #allocation3 [shape = 's32[2]{0}', space=sflag, size = 0x8, scoped, tag = 'scoped memory for tpu_custom_call.1']
    %9 = vsyncpa [#allocation3], 0
    %s10 = scalar_lea.sflag [#allocation3], 1
    %11 = vsyncpa %s10, 0
    loop: start=0, step=1, limit=4
    $region2: #{tpu_custom_call.1} parent=1 // loop_pre_header
      _
    $region3: #{tpu_custom_call.1} parent=1 // loop_header
      %s13 = sphi 0, %s17
      %p14 = scmp.ge.s32.totalorder %s13, 4
      %s23 = sphi 0, %s25
      %s26 = sphi 0, %s23
      %s27 = sphi 0, %s26
      %s43 = sphi 0, %s27
      %s49 = sphi 0, %s51
      %s52 = sphi 0, %s49
      %s53 = sphi 0, %s52
      %s69 = sphi 0, %s53
      %s73 = sphi 0, %s73
      %s75 = sphi 0, %s73
      %s76 = sphi 0, %s75
      %s90 = sphi 0, %s76
      %s94 = sphi 0, %s94
      %s96 = sphi 0, %s94
      %s97 = sphi 0, %s96
      %s111 = sphi 0, %s97
      %s117 = sphi 0, %s119
      %s120 = sphi 0, %s117
      %s121 = sphi 0, %s120
      %s137 = sphi 0, %s121
    $region4: #{tpu_custom_call.1} parent=1 // loop_header_branch
      %16 = sbr.rel (%p14) target = $region8
    $region5: #{tpu_custom_call.1} parent=1 // loop_body
      %s18 = ssub.s32 %s13, 1
      %s19 = ssub.s32 %s13, 2
      %s20 = sadd.s32 %s13, 1
      %s21 = ssub.s32 %s13, %s20
      %p22 = scmp.eq.s32.totalorder %s21, 0
      %s24 = sadd.s32 %s23, 1
      %s25 = scalar_select %p22, %s23, %s24
      %p28 = pneg %p22
      %p29 = scmp.eq.s32.totalorder %s13, 1
      %p30 = por %p28, %p29
      %p31 = scmp.ne.s32.totalorder %s23, %s26
      %p32 = scmp.eq.s32.totalorder %s13, 0
      %p33 = por %p31, %p32
      %p34 = scmp.ne.s32.totalorder %s23, %s26
      %p35 = scmp.eq.s32.totalorder %s18, 1
      %p36 = por %p34, %p35
      %p37 = scmp.ne.s32.totalorder %s26, %s27
      %p38 = scmp.eq.s32.totalorder %s18, 0
      %p39 = por %p37, %p38
      %p40 = scmp.ne.s32.totalorder %s26, %s27
      %p41 = scmp.eq.s32.totalorder %s19, 1
      %p42 = por %p40, %p41
      %p44 = scmp.ne.s32.totalorder %s27, %s43
      %p45 = scmp.eq.s32.totalorder %s19, 0
      %p46 = por %p44, %p45
      %s47 = ssub.s32 %s13, %s20
      %p48 = scmp.eq.s32.totalorder %s47, 0
      %s50 = sadd.s32 %s49, 1
      %s51 = scalar_select %p48, %s49, %s50
      %p54 = pneg %p48
      %p55 = scmp.eq.s32.totalorder %s13, 1
      %p56 = por %p54, %p55
      %p57 = scmp.ne.s32.totalorder %s49, %s52
      %p58 = scmp.eq.s32.totalorder %s13, 0
      %p59 = por %p57, %p58
      %p60 = scmp.ne.s32.totalorder %s49, %s52
      %p61 = scmp.eq.s32.totalorder %s18, 1
      %p62 = por %p60, %p61
      %p63 = scmp.ne.s32.totalorder %s52, %s53
      %p64 = scmp.eq.s32.totalorder %s18, 0
      %p65 = por %p63, %p64
      %p66 = scmp.ne.s32.totalorder %s52, %s53
      %p67 = scmp.eq.s32.totalorder %s19, 1
      %p68 = por %p66, %p67
      %p70 = scmp.ne.s32.totalorder %s53, %s69
      %p71 = scmp.eq.s32.totalorder %s19, 0
      %p72 = por %p70, %p71
      %s74 = sadd.s32 %s73, 1
      %p77 = scmp.eq.s32.totalorder %s13, 1
      %p78 = scmp.ne.s32.totalorder %s73, %s75
      %p79 = scmp.eq.s32.totalorder %s13, 0
      %p80 = por %p78, %p79
      %p81 = scmp.ne.s32.totalorder %s73, %s75
      %p82 = scmp.eq.s32.totalorder %s18, 1
      %p83 = por %p81, %p82
      %p84 = scmp.ne.s32.totalorder %s75, %s76
      %p85 = scmp.eq.s32.totalorder %s18, 0
      %p86 = por %p84, %p85
      %p87 = scmp.ne.s32.totalorder %s75, %s76
      %p88 = scmp.eq.s32.totalorder %s19, 1
      %p89 = por %p87, %p88
      %p91 = scmp.ne.s32.totalorder %s76, %s90
      %p92 = scmp.eq.s32.totalorder %s19, 0
      %p93 = por %p91, %p92
      %s95 = sadd.s32 %s94, 1
      %p98 = scmp.eq.s32.totalorder %s13, 1
      %p99 = scmp.ne.s32.totalorder %s94, %s96
      %p100 = scmp.eq.s32.totalorder %s13, 0
      %p101 = por %p99, %p100
      %p102 = scmp.ne.s32.totalorder %s94, %s96
      %p103 = scmp.eq.s32.totalorder %s18, 1
      %p104 = por %p102, %p103
      %p105 = scmp.ne.s32.totalorder %s96, %s97
      %p106 = scmp.eq.s32.totalorder %s18, 0
      %p107 = por %p105, %p106
      %p108 = scmp.ne.s32.totalorder %s96, %s97
      %p109 = scmp.eq.s32.totalorder %s19, 1
      %p110 = por %p108, %p109
      %p112 = scmp.ne.s32.totalorder %s97, %s111
      %p113 = scmp.eq.s32.totalorder %s19, 0
      %p114 = por %p112, %p113
      %s115 = ssub.s32 %s13, %s20
      %p116 = scmp.eq.s32.totalorder %s115, 0
      %s118 = sadd.s32 %s117, 1
      %s119 = scalar_select %p116, %s117, %s118
      %p122 = pneg %p116
      %p123 = scmp.eq.s32.totalorder %s13, 1
      %p124 = por %p122, %p123
      %p125 = scmp.ne.s32.totalorder %s117, %s120
      %p126 = scmp.eq.s32.totalorder %s13, 0
      %p127 = por %p125, %p126
      %p128 = scmp.ne.s32.totalorder %s117, %s120
      %p129 = scmp.eq.s32.totalorder %s18, 1
      %p130 = por %p128, %p129
      %p131 = scmp.ne.s32.totalorder %s120, %s121
      %p132 = scmp.eq.s32.totalorder %s18, 0
      %p133 = por %p131, %p132
      %p134 = scmp.ne.s32.totalorder %s120, %s121
      %p135 = scmp.eq.s32.totalorder %s19, 1
      %p136 = por %p134, %p135
      %p138 = scmp.ne.s32.totalorder %s121, %s137
      %p139 = scmp.eq.s32.totalorder %s19, 0
      %p140 = por %p138, %p139
      %p141 = scmp.le.s32.totalorder 1, %s13
      %p142 = scmp.lt.s32.totalorder %s13, 3
      %p143 = pnand %p141, %p142
      %p144 = pneg %p143
      // Predicated region
      $region9: #{tpu_custom_call.1} parent=5 // pred_check
        _
      $region10: #{tpu_custom_call.1} parent=5 // pred_check_branch
        %146 = sbr.rel (%p143) target = $region12
      $region11: #{tpu_custom_call.1} parent=5 // pred_region
        %s147 = ssub.s32 %s13, 1
        // Predicated region
        $region13: #{tpu_custom_call.1} parent=11 // pred_check
          %p148 = pneg %p86
        $region14: #{tpu_custom_call.1} parent=11 // pred_check_branch
          %150 = sbr.rel (%p148) target = $region16
        $region15: #{tpu_custom_call.1} parent=11 // pred_region
          _
        $region16: #{tpu_custom_call.1} parent=11 // pred_fallthru
          _
        // Predicated region
        $region17: #{tpu_custom_call.1} parent=11 // pred_check
          %p151 = pneg %p107
        $region18: #{tpu_custom_call.1} parent=11 // pred_check_branch
          %153 = sbr.rel (%p151) target = $region20
        $region19: #{tpu_custom_call.1} parent=11 // pred_region
          _
        $region20: #{tpu_custom_call.1} parent=11 // pred_fallthru
          _
      $region12: #{tpu_custom_call.1} parent=5 // pred_fallthru
        _
      %p154 = scmp.lt.s32.totalorder %s13, 2
      // Predicated region
      $region21: #{tpu_custom_call.1} parent=5 // pred_check
        %p155 = pneg %p154
      $region22: #{tpu_custom_call.1} parent=5 // pred_check_branch
        %157 = sbr.rel (%p155) target = $region24
      $region23: #{tpu_custom_call.1} parent=5 // pred_region
        // Predicated region
        $region25: #{tpu_custom_call.1} parent=23 // pred_check
          %p158 = pneg %p33
        $region26: #{tpu_custom_call.1} parent=23 // pred_check_branch
          %160 = sbr.rel (%p158) target = $region28
        $region27: #{tpu_custom_call.1} parent=23 // pred_region
          %p161 = scmp.lt.s32.totalorder %s13, 1
          %s162 = scalar_select %p161, %s13, 1
          %s163 = smul.addr %s162, 2
          %s164 = smul.addr %s163, 8
          %s165 = scalar_lea.vmem %s0, %s164
        $region28: #{tpu_custom_call.1} parent=23 // pred_fallthru
          _
        // Predicated region
        $region29: #{tpu_custom_call.1} parent=23 // pred_check
          %p166 = pneg %p59
        $region30: #{tpu_custom_call.1} parent=23 // pred_check_branch
          %168 = sbr.rel (%p166) target = $region32
        $region31: #{tpu_custom_call.1} parent=23 // pred_region
          %p169 = scmp.lt.s32.totalorder %s13, 1
          %s170 = scalar_select %p169, %s13, 1
          %s171 = smul.addr %s170, 2
          %s172 = smul.addr %s171, 8
          %s173 = scalar_lea.vmem %s1, %s172
        $region32: #{tpu_custom_call.1} parent=23 // pred_fallthru
          _
      $region24: #{tpu_custom_call.1} parent=5 // pred_fallthru
        _
      %p174 = scmp.le.s32.totalorder 1, %s13
      %p175 = scmp.lt.s32.totalorder %s13, 3
      %p176 = pnand %p174, %p175
      %p177 = pneg %p176
      // Predicated region
      $region33: #{tpu_custom_call.1} parent=5 // pred_check
        _
      $region34: #{tpu_custom_call.1} parent=5 // pred_check_branch
        %179 = sbr.rel (%p176) target = $region36
      $region35: #{tpu_custom_call.1} parent=5 // pred_region
        %s180 = ssub.s32 %s13, 1
        %p181 = scmp.lt.s32.totalorder %s18, 1
        %s182 = scalar_select %p181, %s18, 1
        %s183 = smul.addr %s182, 2
        %s184 = smul.addr %s183, 8
        %s185 = scalar_lea.vmem %s0, %s184
        %p186 = pneg %p39
        %p187 = pneg %p36
        %p188 = scmp.lt.s32.totalorder %s18, 1
        %s189 = scalar_select %p188, %s18, 1
        %s190 = smul.addr %s189, 2
        %s191 = smul.addr %s190, 8
        %s192 = scalar_lea.vmem %s1, %s191
        %p193 = pneg %p65
        %p194 = pneg %p62
        %p195 = pneg %p86
        %p196 = pneg %p83
        %p197 = pneg %p107
        %p198 = pneg %p104
        %p199 = pneg %p133
        %p200 = pneg %p130
        %s201 = sand.u32 %s120, 1
        %s202 = scalar_lea.sflag [#allocation3], %s201
        %s203 = sand.u32 %s120, 1
        %s204 = smul.addr %s203, 16
        %s205 = scalar_lea.vmem [#allocation2], %s204
        %p206 = scmp.lt.s32.totalorder %s18, 1
        %s207 = scalar_select %p206, %s18, 1
        %s208 = smul.addr %s207, 2
        %s209 = smul.addr %s208, 8
        %s210 = scalar_lea.vmem %s0, %s209
        %p211 = scmp.lt.s32.totalorder %s18, 1
        %s212 = scalar_select %p211, %s18, 1
        %s213 = smul.addr %s212, 2
        %s214 = smul.addr %s213, 8
        %s215 = scalar_lea.vmem %s1, %s214
        %v216 = vld [vmem:[%s210] sm:$0xff]
        %v217 = vld [vmem:[%s210 + $0x8] sm:$0xff]
        %v218 = vld [vmem:[%s2] sm:$0xff]
        %v219 = vld [vmem:[%s3] sm:$0x1]
        %v221 = vlaneseq
        %v222 = vshrl.u32 %v221, 7
        %v223 = vsub.s32 0, %v222
        %v224 = vrot.slane %v219, %v223
        %vm226 = vcmask 64512
        %v228 = vsel %vm226, %v216, 0
        %v231 = vsel %vm226, %v217, 0
        %233 = vmatprep.subr.mxu0 0.0
        %234 = vmatpush1.msra.mxu0 %v218
        %235 = vmatprep.subr.mxu0 0.0
        %236 = vmatpush1.msra.mxu0 0.0
        %237 = vmatprep.subr.mxu0 0.0
        %238 = vmatpush1.msra.mxu0 0.0
        %239 = vmatprep.subr.mxu0 0.0
        %240 = vmatpush1.msra.mxu0 0.0
        %241 = vmatprep.subr.mxu0 0.0
        %242 = vmatpush1.msra.mxu0 0.0
        %243 = vmatprep.subr.mxu0 0.0
        %244 = vmatpush1.msra.mxu0 0.0
        %245 = vmatprep.subr.mxu0 0.0
        %246 = vmatpush1.msra.mxu0 0.0
        %247 = vmatprep.subr.mxu0 0.0
        %248 = vmatpush1.msra.mxu0 0.0
        %249 = vmatprep.subr.mxu0 0.0
        %250 = vmatpush1.msra.mxu0 0.0
        %251 = vmatprep.subr.mxu0 0.0
        %252 = vmatpush1.msra.mxu0 0.0
        %253 = vmatprep.subr.mxu0 0.0
        %254 = vmatpush1.msra.mxu0 0.0
        %255 = vmatprep.subr.mxu0 0.0
        %256 = vmatpush1.msra.mxu0 0.0
        %257 = vmatprep.subr.mxu0 0.0
        %258 = vmatpush1.msra.mxu0 0.0
        %259 = vmatprep.subr.mxu0 0.0
        %260 = vmatpush1.msra.mxu0 0.0
        %261 = vmatprep.subr.mxu0 0.0
        %262 = vmatpush1.msra.mxu0 0.0
        %263 = vmatprep.subr.mxu0 0.0
        %264 = vmatpush1.msra.mxu0 0.0
        %265 = vmatprep.subr.mxu0 0.0
        %266 = vmatpush1.msra.mxu0 0.0
        %267 = vmatprep.subr.mxu0 0.0
        %268 = vmatpush1.msra.mxu0 0.0
        %269 = vmatprep.subr.mxu0 0.0
        %270 = vmatpush1.msra.mxu0 0.0
        %271 = vmatprep.subr.mxu0 0.0
        %272 = vmatpush1.msra.mxu0 0.0
        %273 = vmatprep.subr.mxu0 0.0
        %274 = vmatpush1.msra.mxu0 0.0
        %275 = vmatprep.subr.mxu0 0.0
        %276 = vmatpush1.msra.mxu0 0.0
        %277 = vmatprep.subr.mxu0 0.0
        %278 = vmatpush1.msra.mxu0 0.0
        %279 = vmatprep.subr.mxu0 0.0
        %280 = vmatpush1.msra.mxu0 0.0
        %281 = vmatprep.subr.mxu0 0.0
        %282 = vmatpush1.msra.mxu0 0.0
        %283 = vmatprep.subr.mxu0 0.0
        %284 = vmatpush1.msra.mxu0 0.0
        %285 = vmatprep.subr.mxu0 0.0
        %286 = vmatpush1.msra.mxu0 0.0
        %287 = vmatprep.subr.mxu0 0.0
        %288 = vmatpush1.msra.mxu0 0.0
        %289 = vmatprep.subr.mxu0 0.0
        %290 = vmatpush1.msra.mxu0 0.0
        %291 = vmatprep.subr.mxu0 0.0
        %292 = vmatpush1.msra.mxu0 0.0
        %293 = vmatprep.subr.mxu0 0.0
        %294 = vmatpush1.msra.mxu0 0.0
        %295 = vmatprep.subr.mxu0 0.0
        %296 = vmatpush1.msra.mxu0 0.0
        %297 = vmatprep.mubr.f32.mxu0 0.0
        %298 = vmatmul.mubr.f32.gmra.mrb[0].mxu0 %v228
        %v299 = vpop.f32.mrb[0].mxu0
        %v300 = vadd.f32 %v224, %v299
        %v301 = vpop.f32.mrb[0].mxu0
        %302 = vmatprep.mubr.f32.mxu0 0.0
        %303 = vmatmul.mubr.f32.gmra.mrb[0].mxu0 %v231
        %v304 = vpop.f32.mrb[0].mxu0
        %v305 = vadd.f32 %v224, %v304
        %v306 = vpop.f32.mrb[0].mxu0
        %307 = vdwg.mxu0
        %v308 = vld [vmem:[%s215] sm:$0xff]
        %v309 = vld [vmem:[%s215 + $0x8] sm:$0xff]
        %vm310 = vcmask 130048
        %v312 = vsel %vm310, %v308, 0
        %v315 = vsel %vm310, %v309, 0
        %317 = vmatprep.subr.mxu0 0.0
        %318 = vmatpush1.msra.mxu0 %v300
        %319 = vmatprep.subr.mxu0 0.0
        %320 = vmatpush1.msra.mxu0 %v305
        %321 = vmatprep.subr.mxu0 0.0
        %322 = vmatpush1.msra.mxu0 0.0
        %323 = vmatprep.subr.mxu0 0.0
        %324 = vmatpush1.msra.mxu0 0.0
        %325 = vmatprep.subr.mxu0 0.0
        %326 = vmatpush1.msra.mxu0 0.0
        %327 = vmatprep.subr.mxu0 0.0
        %328 = vmatpush1.msra.mxu0 0.0
        %329 = vmatprep.subr.mxu0 0.0
        %330 = vmatpush1.msra.mxu0 0.0
        %331 = vmatprep.subr.mxu0 0.0
        %332 = vmatpush1.msra.mxu0 0.0
        %333 = vmatprep.subr.mxu0 0.0
        %334 = vmatpush1.msra.mxu0 0.0
        %335 = vmatprep.subr.mxu0 0.0
        %336 = vmatpush1.msra.mxu0 0.0
        %337 = vmatprep.subr.mxu0 0.0
        %338 = vmatpush1.msra.mxu0 0.0
        %339 = vmatprep.subr.mxu0 0.0
        %340 = vmatpush1.msra.mxu0 0.0
        %341 = vmatprep.subr.mxu0 0.0
        %342 = vmatpush1.msra.mxu0 0.0
        %343 = vmatprep.subr.mxu0 0.0
        %344 = vmatpush1.msra.mxu0 0.0
        %345 = vmatprep.subr.mxu0 0.0
        %346 = vmatpush1.msra.mxu0 0.0
        %347 = vmatprep.subr.mxu0 0.0
        %348 = vmatpush1.msra.mxu0 0.0
        %349 = vmatprep.subr.mxu0 0.0
        %350 = vmatpush1.msra.mxu0 0.0
        %351 = vmatprep.subr.mxu0 0.0
        %352 = vmatpush1.msra.mxu0 0.0
        %353 = vmatprep.subr.mxu0 0.0
        %354 = vmatpush1.msra.mxu0 0.0
        %355 = vmatprep.subr.mxu0 0.0
        %356 = vmatpush1.msra.mxu0 0.0
        %357 = vmatprep.subr.mxu0 0.0
        %358 = vmatpush1.msra.mxu0 0.0
        %359 = vmatprep.subr.mxu0 0.0
        %360 = vmatpush1.msra.mxu0 0.0
        %361 = vmatprep.subr.mxu0 0.0
        %362 = vmatpush1.msra.mxu0 0.0
        %363 = vmatprep.subr.mxu0 0.0
        %364 = vmatpush1.msra.mxu0 0.0
        %365 = vmatprep.subr.mxu0 0.0
        %366 = vmatpush1.msra.mxu0 0.0
        %367 = vmatprep.subr.mxu0 0.0
        %368 = vmatpush1.msra.mxu0 0.0
        %369 = vmatprep.subr.mxu0 0.0
        %370 = vmatpush1.msra.mxu0 0.0
        %371 = vmatprep.subr.mxu0 0.0
        %372 = vmatpush1.msra.mxu0 0.0
        %373 = vmatprep.subr.mxu0 0.0
        %374 = vmatpush1.msra.mxu0 0.0
        %375 = vmatprep.subr.mxu0 0.0
        %376 = vmatpush1.msra.mxu0 0.0
        %377 = vmatprep.subr.mxu0 0.0
        %378 = vmatpush1.msra.mxu0 0.0
        %379 = vmatprep.subr.mxu0 0.0
        %380 = vmatpush1.msra.mxu0 0.0
        %381 = vmatprep.mubr.f32.mxu0 0.0
        %382 = vmatmul.mubr.f32.gmra.mrb[0].mxu0 %v312
        %v383 = vpop.f32.mrb[0].mxu0
        %v384 = vadd.f32 0.0, %v383
        %v385 = vpop.f32.mrb[0].mxu0
        %386 = vmatprep.mubr.f32.mxu0 0.0
        %387 = vmatmul.mubr.f32.gmra.mrb[0].mxu0 %v315
        %v388 = vpop.f32.mrb[0].mxu0
        %v389 = vadd.f32 0.0, %v388
        %v390 = vpop.f32.mrb[0].mxu0
        %391 = vdwg.mxu0
        %vm392 = vcmask 261120
        %393 = vst.msk [vmem:[%s205] sm:$0xff] %vm392, %v384
        %394 = vst.msk [vmem:[%s205 + $0x8] sm:$0xff] %vm392, %v389
        %s395 = sand.u32 %s120, 1
        %s396 = scalar_lea.sflag [#allocation3], %s395
        %s397 = sand.u32 %s120, 1
        %s398 = smul.addr %s397, 16
        %s399 = scalar_lea.vmem [#allocation2], %s398
        // Predicated region
        $region37: #{tpu_custom_call.1} parent=35 // pred_check
          %p400 = pneg %p130
        $region38: #{tpu_custom_call.1} parent=35 // pred_check_branch
          %402 = sbr.rel (%p400) target = $region40
        $region39: #{tpu_custom_call.1} parent=35 // pred_region
          %s404 = ssub.s32 256, 256
          %405 = vsyncadd %s396, %s404
          %s406 = smul.addr %s18, 2
          %s407 = smul.addr %s406, 128
          %s408 = scalar_lea.hbm %s4, %s407
          %s409 = sshll.u32 %s399, 4
          %s410 = int_to_ptr.vmem [resolvable:$true] %s409
          %415 = dma.vmem_to_hbm [thread:$0]  %s410, 256, %s408, %s396, 128, 128, 8
        $region40: #{tpu_custom_call.1} parent=35 // pred_fallthru
          _
      $region36: #{tpu_custom_call.1} parent=5 // pred_fallthru
        _
      %p416 = scmp.le.s32.totalorder 2, %s13
      // Predicated region
      $region41: #{tpu_custom_call.1} parent=5 // pred_check
        %p417 = pneg %p416
      $region42: #{tpu_custom_call.1} parent=5 // pred_check_branch
        %419 = sbr.rel (%p417) target = $region44
      $region43: #{tpu_custom_call.1} parent=5 // pred_region
        %s420 = ssub.s32 %s13, 2
        // Predicated region
        $region45: #{tpu_custom_call.1} parent=43 // pred_check
          %p421 = pneg %p136
        $region46: #{tpu_custom_call.1} parent=43 // pred_check_branch
          %423 = sbr.rel (%p421) target = $region48
        $region47: #{tpu_custom_call.1} parent=43 // pred_region
          %s424 = sand.u32 %s121, 1
          %s425 = scalar_lea.sflag [#allocation3], %s424
          %s426 = sand.u32 %s121, 1
          %s427 = smul.addr %s426, 16
          %s428 = scalar_lea.vmem [#allocation2], %s427
          %429 = dma.done %s425, 256
        $region48: #{tpu_custom_call.1} parent=43 // pred_fallthru
          _
      $region44: #{tpu_custom_call.1} parent=5 // pred_fallthru
        _
    $region6: #{tpu_custom_call.1} parent=1 // loop_footer
      %s17 = sadd.s32 1, %s13
    $region7: #{tpu_custom_call.1} parent=1 // loop_footer_branch
      %12 = sbr.rel target = $region3
    $region8: #{tpu_custom_call.1} parent=1 // loop_exit
      _
    %430 = vsyncpa [#allocation3], 1
    %s431 = scalar_lea.sflag [#allocation3], 1
    %432 = vsyncpa %s431, 1

</llo_original>
